<compile_context>
chip_gen: v6e
topology: v6e:2x2x1
jax: 0.10.0
libtpu: 0.0.40
codegen_flags: <defaults>
</compile_context>

<pallas_src>
import jax
import jax.numpy as jnp
from jax import lax
from jax.experimental import pallas as pl
from jax.experimental.pallas import tpu as pltpu


def _round_up(x, m):
    return ((x + m - 1) // m) * m


# ----------------------------------------------------------------------------
# Pallas kernel: one flattened block of `tile` (graph,node) rows per grid step.
# ----------------------------------------------------------------------------
def _graph_node_feature_kernel(idx_ref, tab_ref, out_ref):
    R, K = idx_ref.shape           # rows per block, indices per row (F + 2)
    Tpad, H = tab_ref.shape        # padded combined-table rows / hidden_dim

    idx = idx_ref[...]             # int32 [R, K]
    col = lax.broadcasted_iota(jnp.int32, (R, Tpad), 1)

    # Summed one-hot over the combined table, built as K static 2-D compares.
    # Accumulate in f32 (native VALU on all chip generations), single terminal
    # bf16 cast for the MXU operand.  The -1 sentinel matches no column
    # (iota >= 0), so sentinel slots and row padding contribute nothing.
    oh = (idx[:, 0:1] == col).astype(jnp.float32)
    for k in range(1, K):          # K is static and tiny
        oh = oh + (idx[:, k:k + 1] == col).astype(jnp.float32)

    # One MXU matmul fuses: atom-embedding gather + sum over atom features,
    # in/out-degree gathers + adds, and the graph-token "concat" (row 0 of
    # each graph selects only the graph-token table row).  Full-block store:
    # (multiple-of-8, 128) -> unmasked lane-dense vst, no slicing.
    out_ref[...] = jnp.dot(oh.astype(jnp.bfloat16), tab_ref[...],
                           preferred_element_type=jnp.float32)


# ----------------------------------------------------------------------------
# Wrapper: build combined table / flattened index rows, call the kernel.
# ----------------------------------------------------------------------------
def graph_node_feature_pallas(x, in_degree, out_degree, params, *, row_tile=512):
    atom_tab = params["atom_tab"]          # [num_atoms + 1, H]
    in_tab = params["in_tab"]              # [num_in_degree, H]
    out_tab = params["out_tab"]            # [num_out_degree, H]
    gtok = params["graph_token"]           # [1, H]

    B, N, F = x.shape
    H = atom_tab.shape[1]
    A1, NI = atom_tab.shape[0], in_tab.shape[0]
    M = N + 1                              # graph token + nodes
    K = F + 2                              # atom feats + in_degree + out_degree

    # Combined embedding table (bf16 MXU operand, f32 accumulation).  Pad the
    # row count to a multiple of 8 with zero rows (never selected; zero anyway).
    table = jnp.concatenate([gtok, atom_tab, in_tab, out_tab], axis=0)
    T = table.shape[0]
    Tpad = _round_up(T, 8)
    table = jnp.pad(table, ((0, Tpad - T), (0, 0)))
    table_bf16 = table.astype(jnp.bfloat16)

    # Flattened per-row index tensor [B*M, K]:
    #   graph row 0 : [0, -1, ..., -1]  -> selects only the graph-token row
    #   node rows   : atom ids (+1), in_degree (+1+A1), out_degree (+1+A1+NI)
    # -1 is an "empty" sentinel (matches nothing -> zero contribution).
    atom_idx = x.astype(jnp.int32) + 1                                  # [B,N,F]
    in_idx = in_degree.astype(jnp.int32)[..., None] + (1 + A1)          # [B,N,1]
    out_idx = out_degree.astype(jnp.int32)[..., None] + (1 + A1 + NI)   # [B,N,1]
    node_idx = jnp.concatenate([atom_idx, in_idx, out_idx], axis=-1)    # [B,N,K]
    tok_row = jnp.concatenate(
        [jnp.zeros((B, 1, 1), jnp.int32),
         jnp.full((B, 1, K - 1), -1, jnp.int32)], axis=-1)              # [B,1,K]
    idx = jnp.concatenate([tok_row, node_idx], axis=1).reshape(B * M, K)

    # Row tiling: default 512 (multiple of 256 for the v6e MXU M dim, within
    # the v5e vreg-pressure cap), clamped + 8-aligned for tiny inputs.  Only
    # the flat tail is padded (with the -1 sentinel) and later dropped.
    rows = B * M
    tile = min(_round_up(row_tile, 8), _round_up(rows, 8))
    rows_pad = _round_up(rows, tile)
    if rows_pad != rows:
        idx = jnp.pad(idx, ((0, rows_pad - rows), (0, 0)), constant_values=-1)

    out_flat = pl.pallas_call(
        _graph_node_feature_kernel,
        out_shape=jax.ShapeDtypeStruct((rows_pad, H), jnp.float32),
        grid_spec=pltpu.PrefetchScalarGridSpec(
            num_scalar_prefetch=0,
            grid=(rows_pad // tile,),
            in_specs=[
                pl.BlockSpec((tile, K), lambda r: (r, 0)),
                # Constant index_map -> table stays VMEM-resident across steps.
                # TODO(synk): at real Graphormer vocab sizes (T ~ 4.7K) tile T
                # as an extra "arbitrary" grid axis with an f32 accumulator and
                # single-buffer this operand (pipeline_mode=pl.Buffered(1)).
                pl.BlockSpec((Tpad, H), lambda r: (0, 0)),
            ],
            out_specs=pl.BlockSpec((tile, H), lambda r: (r, 0)),
        ),
        compiler_params=pltpu.CompilerParams(
            dimension_semantics=("parallel",)),
    )(idx, table_bf16)

    return out_flat[:rows].reshape(B, M, H)   # [B, N+1, H]


# ----------------------------------------------------------------------------
# Pure-JAX f32 reference (mirrors the PyTorch forward, default path).
# ----------------------------------------------------------------------------
def graph_node_feature_reference(x, in_degree, out_degree, params):
    atom_feature = params["atom_tab"][x].sum(axis=-2)            # [B,N,H]
    node_feature = (atom_feature
                    + params["in_tab"][in_degree]
                    + params["out_tab"][out_degree])             # [B,N,H]
    B = x.shape[0]
    H = params["graph_token"].shape[1]
    gtok = jnp.broadcast_to(params["graph_token"][None], (B, 1, H))
    return jnp.concatenate([gtok, node_feature], axis=1)         # [B,N+1,H]


# ----------------------------------------------------------------------------
if __name__ == "__main__":
    # Module config
    num_heads = 8                       # stored by the module, unused in forward
    num_atoms = 32
    num_in_degree = 16
    num_out_degree = 16
    hidden_dim = 128                    # lane-dense output layout
    n_layers = 4                        # only scales Linear init; no Linear here

    # Data sizes
    B = 2                               # n_graph
    N = 8                               # n_node
    F = 3                               # atom feature count per node

    key = jax.random.PRNGKey(0)
    keys = jax.random.split(key, 7)

    # Deterministic parameter init (init_params: Embedding ~ N(0, 0.02); the
    # padding_idx rows are overwritten by init_params in the reference module,
    # so no row-zeroing is applied here either).
    params = {
        "atom_tab": 0.02 * jax.random.normal(
            keys[0], (num_atoms + 1, hidden_dim), jnp.float32),
        "in_tab": 0.02 * jax.random.normal(
            keys[1], (num_in_degree, hidden_dim), jnp.float32),
        "out_tab": 0.02 * jax.random.normal(
            keys[2], (num_out_degree, hidden_dim), jnp.float32),
        "graph_token": 0.02 * jax.random.normal(
            keys[3], (1, hidden_dim), jnp.float32),
    }

    # batched_data
    x = jax.random.randint(keys[4], (B, N, F), 0, num_atoms + 1, dtype=jnp.int32)
    in_degree = jax.random.randint(keys[5], (B, N), 0, num_in_degree,
                                   dtype=jnp.int32)
    out_degree = jax.random.randint(keys[6], (B, N), 0, num_out_degree,
                                    dtype=jnp.int32)

    out = graph_node_feature_pallas(x, in_degree, out_degree, params)
    out = jax.block_until_ready(out)

    ref = graph_node_feature_reference(x, in_degree, out_degree, params)
    ref = jax.block_until_ready(ref)

    assert out.shape == (B, N + 1, hidden_dim), out.shape
    # Tolerance relaxed vs a pure-f32 reference: the only difference is bf16
    # rounding of the embedding tables (one-hot counts and f32 accumulation
    # are exact); sums of <= F+2 terms of magnitude ~0.02 stay well within 5e-3.
    err = jnp.max(jnp.abs(out - ref))
    assert jnp.allclose(out, ref, rtol=1e-2, atol=5e-3), f"max abs err {err}"

    print("KERNEL_OK")
</pallas_src>

<mosaic_0001>
module attributes {stable_mosaic.version = 11 : i64} {
  func.func @_graph_node_feature_kernel(%arg0: i32, %arg1: memref<24x5xi32, #tpu.memory_space<vmem>>, %arg2: memref<72x128xbf16, #tpu.memory_space<vmem>>, %arg3: memref<24x128xf32, #tpu.memory_space<vmem>>) attributes {dimension_semantics = [#tpu.dimension_semantics<parallel>], iteration_bounds = array<i64: 1>, scalar_prefetch = 0 : i64, scratch_operands = 0 : i64, tpu.core_type = #tpu.core_type<tc>, window_params = [{transform_indices = @transform_0, window_bounds = array<i64: 24, 5>}, {pipeline_mode = #tpu.pipeline_mode<synchronous>, transform_indices = @transform_1, window_bounds = array<i64: 72, 128>}, {transform_indices = @transform_2, window_bounds = array<i64: 24, 128>}]} {
    %c0 = arith.constant 0 : index
    %c0_0 = arith.constant 0 : index
    %0 = vector.load %arg1[%c0, %c0_0] : memref<24x5xi32, #tpu.memory_space<vmem>>, vector<24x5xi32>
    %1 = tpu.iota {dimensions = array<i32: 1>} : vector<24x72xi32>
    %2 = vector.extract_strided_slice %0 {offsets = [0, 0], sizes = [24, 1], strides = [1, 1]} : vector<24x5xi32> to vector<24x1xi32>
    %3 = vector.broadcast %2 : vector<24x1xi32> to vector<24x72xi32>
    %4 = arith.cmpi eq, %3, %1 : vector<24x72xi32>
    %5 = arith.extui %4 : vector<24x72xi1> to vector<24x72xi32>
    %6 = arith.sitofp %5 : vector<24x72xi32> to vector<24x72xf32>
    %7 = vector.extract_strided_slice %0 {offsets = [0, 1], sizes = [24, 1], strides = [1, 1]} : vector<24x5xi32> to vector<24x1xi32>
    %8 = vector.broadcast %7 : vector<24x1xi32> to vector<24x72xi32>
    %9 = arith.cmpi eq, %8, %1 : vector<24x72xi32>
    %10 = arith.extui %9 : vector<24x72xi1> to vector<24x72xi32>
    %11 = arith.sitofp %10 : vector<24x72xi32> to vector<24x72xf32>
    %12 = arith.addf %6, %11 : vector<24x72xf32>
    %13 = vector.extract_strided_slice %0 {offsets = [0, 2], sizes = [24, 1], strides = [1, 1]} : vector<24x5xi32> to vector<24x1xi32>
    %14 = vector.broadcast %13 : vector<24x1xi32> to vector<24x72xi32>
    %15 = arith.cmpi eq, %14, %1 : vector<24x72xi32>
    %16 = arith.extui %15 : vector<24x72xi1> to vector<24x72xi32>
    %17 = arith.sitofp %16 : vector<24x72xi32> to vector<24x72xf32>
    %18 = arith.addf %12, %17 : vector<24x72xf32>
    %19 = vector.extract_strided_slice %0 {offsets = [0, 3], sizes = [24, 1], strides = [1, 1]} : vector<24x5xi32> to vector<24x1xi32>
    %20 = vector.broadcast %19 : vector<24x1xi32> to vector<24x72xi32>
    %21 = arith.cmpi eq, %20, %1 : vector<24x72xi32>
    %22 = arith.extui %21 : vector<24x72xi1> to vector<24x72xi32>
    %23 = arith.sitofp %22 : vector<24x72xi32> to vector<24x72xf32>
    %24 = arith.addf %18, %23 : vector<24x72xf32>
    %25 = vector.extract_strided_slice %0 {offsets = [0, 4], sizes = [24, 1], strides = [1, 1]} : vector<24x5xi32> to vector<24x1xi32>
    %26 = vector.broadcast %25 : vector<24x1xi32> to vector<24x72xi32>
    %27 = arith.cmpi eq, %26, %1 : vector<24x72xi32>
    %28 = arith.extui %27 : vector<24x72xi1> to vector<24x72xi32>
    %29 = arith.sitofp %28 : vector<24x72xi32> to vector<24x72xf32>
    %30 = arith.addf %24, %29 : vector<24x72xf32>
    %31 = arith.truncf %30 : vector<24x72xf32> to vector<24x72xbf16>
    %c0_1 = arith.constant 0 : index
    %c0_2 = arith.constant 0 : index
    %32 = vector.load %arg2[%c0_1, %c0_2] : memref<72x128xbf16, #tpu.memory_space<vmem>>, vector<72x128xbf16>
    %cst = arith.constant dense<0.000000e+00> : vector<24x128xf32>
    %33 = tpu.matmul %31, %32, %cst {dimension_numbers = #tpu.dot_dimension_numbers<[1], [0], [0], [1], [0, 0, 1, 1], [], []>} : vector<24x72xbf16>, vector<72x128xbf16>, vector<24x128xf32> -> vector<24x128xf32>
    %c0_3 = arith.constant 0 : index
    %c0_4 = arith.constant 0 : index
    %34 = vector.load %arg3[%c0_3, %c0_4] : memref<24x128xf32, #tpu.memory_space<vmem>>, vector<24x128xf32>
    tpu.vector_store %arg3[%c0_3, %c0_4], %33 {strides = array<i32>} : memref<24x128xf32, #tpu.memory_space<vmem>>, vector<24x128xf32>,
    return
  }
  func.func @transform_0(%arg0: i32) -> (i32, i32) {
    %c0_i32 = arith.constant 0 : i32
    %c0_i32_0 = arith.constant 0 : i32
    return %arg0, %c0_i32 : i32, i32
  }
  func.func @transform_1(%arg0: i32) -> (i32, i32) {
    %c0_i32 = arith.constant 0 : i32
    %c0_i32_0 = arith.constant 0 : i32
    %c0_i32_1 = arith.constant 0 : i32
    return %c0_i32, %c0_i32_0 : i32, i32
  }
  func.func @transform_2(%arg0: i32) -> (i32, i32) {
    %c0_i32 = arith.constant 0 : i32
    %c0_i32_0 = arith.constant 0 : i32
    return %arg0, %c0_i32 : i32, i32
  }
}

</mosaic_0001>

<llo_original>
// kernel: tpu_custom_call.1
$region0: #{tpu_custom_call.1}
  #allocation0 [shape = 'u32[]', space=smem, size = 0x4, offset = 0x4, fixed_abs, tag = 'smem constant byte address 0x4 - core index']
  #allocation1 [shape = 'u32[144,128]{1,0:T(1,128)}', space=vmem, size = 0x12000, scoped, tag = 'internal scratch']
  %s0 = inlined_call_operand.vmem [shape: s32[24,5], index: 0, kind: input, shape index: {}]
  %s1 = inlined_call_operand.hbm [shape: bf16[72,128], index: 1, kind: input, shape index: {}]
  %s2 = inlined_call_operand.hbm [shape: f32[24,128], index: 2, kind: output, shape index: {}]
  %s3 = sld [smem:[#allocation0]]
  $region22: #{tpu_custom_call.1} parent=0
    _
  %s5 = ssub.s32 1, %s3
  %s6 = scalar_select 0, %s5, %s3
  $region1: #{tpu_custom_call.1} parent=0
    #allocation2 [shape = 'u8[18432]{0}', space=vmem, size = 0x4800, scoped, tag = 'input window, operand 1, single buffered']
    #allocation3 [shape = 's32[1]{0}', space=sflag, size = 0x4, scoped, tag = 'scoped memory for tpu_custom_call.1']
    #allocation4 [shape = 's32[1]{0}', space=sflag, size = 0x4, scoped, tag = 'scoped memory for tpu_custom_call.1']
    #allocation5 [shape = 'u8[12288]{0}', space=vmem, size = 0x3000, scoped, tag = 'output window, operand 0, single buffered']
    %7 = vsyncpa [#allocation3], 0
    %8 = vsyncpa [#allocation4], 0
    // Predicated region
    $region2: #{tpu_custom_call.1} parent=1 // pred_check
      _
    $region3: #{tpu_custom_call.1} parent=1 // pred_check_branch
      %10 = sbr.rel (0) target = $region5
    $region4: #{tpu_custom_call.1} parent=1 // pred_region
      _
    $region5: #{tpu_custom_call.1} parent=1 // pred_fallthru
      _
    // Predicated region
    $region6: #{tpu_custom_call.1} parent=1 // pred_check
      _
    $region7: #{tpu_custom_call.1} parent=1 // pred_check_branch
      %12 = sbr.rel (0) target = $region9
    $region8: #{tpu_custom_call.1} parent=1 // pred_region
      %s14 = ssub.s32 576, 576
      %15 = vsyncadd [#allocation3], %s14
      %s16 = sshll.u32 [#allocation2], 4
      %s17 = int_to_ptr.vmem [resolvable:$true] %s16
      %22 = dma.hbm_to_vmem [thread:$0]  %s1, 576, %s17, [#allocation3], 64, 64, 4
    $region9: #{tpu_custom_call.1} parent=1 // pred_fallthru
      _
    // Predicated region
    $region10: #{tpu_custom_call.1} parent=1 // pred_check
      _
    $region11: #{tpu_custom_call.1} parent=1 // pred_check_branch
      %24 = sbr.rel (0) target = $region13
    $region12: #{tpu_custom_call.1} parent=1 // pred_region
      %25 = dma.done [#allocation3], 576
    $region13: #{tpu_custom_call.1} parent=1 // pred_fallthru
      _
    %v27 = vld [vmem:[%s0] sm:$0xff]
    %v28 = vld [vmem:[%s0 + $0x8] sm:$0xff]
    %v29 = vld [vmem:[%s0 + $0x10] sm:$0xff]
    %v30 = vlaneseq
    %v31 = vand.u32 %v30, 127
    %32 = vset.pattern.permute.xlu0 0
    %33 = vperm.xlu0 %32, %v27
    %v34 = vpop.permute.xlu0 %33
    %35 = vset.pattern.permute.xlu0 0
    %36 = vperm.xlu0 %35, %v28
    %v37 = vpop.permute.xlu0 %36
    %38 = vset.pattern.permute.xlu0 0
    %39 = vperm.xlu0 %38, %v29
    %v40 = vpop.permute.xlu0 %39
    %vm41 = vcmp.eq.s32.totalorder %v34, %v31
    %vm42 = vcmp.eq.s32.totalorder %v37, %v31
    %vm43 = vcmp.eq.s32.totalorder %v40, %v31
    %v44 = vsel %vm41, 1, 0
    %v45 = vsel %vm42, 1, 0
    %v46 = vsel %vm43, 1, 0
    %v47 = vcvt.s32.f32 %v44
    %v48 = vcvt.s32.f32 %v45
    %v49 = vcvt.s32.f32 %v46
    %50 = vset.pattern.permute.xlu0 1
    %51 = vperm.xlu0 %50, %v27
    %v52 = vpop.permute.xlu0 %51
    %53 = vset.pattern.permute.xlu0 1
    %54 = vperm.xlu0 %53, %v28
    %v55 = vpop.permute.xlu0 %54
    %56 = vset.pattern.permute.xlu0 1
    %57 = vperm.xlu0 %56, %v29
    %v58 = vpop.permute.xlu0 %57
    %vm59 = vcmp.eq.s32.totalorder %v52, %v31
    %vm60 = vcmp.eq.s32.totalorder %v55, %v31
    %vm61 = vcmp.eq.s32.totalorder %v58, %v31
    %v62 = vsel %vm59, 1, 0
    %v63 = vsel %vm60, 1, 0
    %v64 = vsel %vm61, 1, 0
    %v65 = vcvt.s32.f32 %v62
    %v66 = vcvt.s32.f32 %v63
    %v67 = vcvt.s32.f32 %v64
    %v68 = vadd.f32 %v47, %v65
    %v69 = vadd.f32 %v48, %v66
    %v70 = vadd.f32 %v49, %v67
    %71 = vset.pattern.permute.xlu0 2
    %72 = vperm.xlu0 %71, %v27
    %v73 = vpop.permute.xlu0 %72
    %74 = vset.pattern.permute.xlu0 2
    %75 = vperm.xlu0 %74, %v28
    %v76 = vpop.permute.xlu0 %75
    %77 = vset.pattern.permute.xlu0 2
    %78 = vperm.xlu0 %77, %v29
    %v79 = vpop.permute.xlu0 %78
    %vm80 = vcmp.eq.s32.totalorder %v73, %v31
    %vm81 = vcmp.eq.s32.totalorder %v76, %v31
    %vm82 = vcmp.eq.s32.totalorder %v79, %v31
    %v83 = vsel %vm80, 1, 0
    %v84 = vsel %vm81, 1, 0
    %v85 = vsel %vm82, 1, 0
    %v86 = vcvt.s32.f32 %v83
    %v87 = vcvt.s32.f32 %v84
    %v88 = vcvt.s32.f32 %v85
    %v89 = vadd.f32 %v68, %v86
    %v90 = vadd.f32 %v69, %v87
    %v91 = vadd.f32 %v70, %v88
    %92 = vset.pattern.permute.xlu0 3
    %93 = vperm.xlu0 %92, %v27
    %v94 = vpop.permute.xlu0 %93
    %95 = vset.pattern.permute.xlu0 3
    %96 = vperm.xlu0 %95, %v28
    %v97 = vpop.permute.xlu0 %96
    %98 = vset.pattern.permute.xlu0 3
    %99 = vperm.xlu0 %98, %v29
    %v100 = vpop.permute.xlu0 %99
    %vm101 = vcmp.eq.s32.totalorder %v94, %v31
    %vm102 = vcmp.eq.s32.totalorder %v97, %v31
    %vm103 = vcmp.eq.s32.totalorder %v100, %v31
    %v104 = vsel %vm101, 1, 0
    %v105 = vsel %vm102, 1, 0
    %v106 = vsel %vm103, 1, 0
    %v107 = vcvt.s32.f32 %v104
    %v108 = vcvt.s32.f32 %v105
    %v109 = vcvt.s32.f32 %v106
    %v110 = vadd.f32 %v89, %v107
    %v111 = vadd.f32 %v90, %v108
    %v112 = vadd.f32 %v91, %v109
    %113 = vset.pattern.permute.xlu0 4
    %114 = vperm.xlu0 %113, %v27
    %v115 = vpop.permute.xlu0 %114
    %116 = vset.pattern.permute.xlu0 4
    %117 = vperm.xlu0 %116, %v28
    %v118 = vpop.permute.xlu0 %117
    %119 = vset.pattern.permute.xlu0 4
    %120 = vperm.xlu0 %119, %v29
    %v121 = vpop.permute.xlu0 %120
    %vm122 = vcmp.eq.s32.totalorder %v115, %v31
    %vm123 = vcmp.eq.s32.totalorder %v118, %v31
    %vm124 = vcmp.eq.s32.totalorder %v121, %v31
    %v125 = vsel %vm122, 1, 0
    %v126 = vsel %vm123, 1, 0
    %v127 = vsel %vm124, 1, 0
    %v128 = vcvt.s32.f32 %v125
    %v129 = vcvt.s32.f32 %v126
    %v130 = vcvt.s32.f32 %v127
    %v131 = vadd.f32 %v110, %v128
    %v132 = vadd.f32 %v111, %v129
    %v133 = vadd.f32 %v112, %v130
    %v134 = vpack.c.bf16 %v132, %v131
    %v135 = vpack.c.bf16 %v133, %v133
    %v136 = vld [vmem:[#allocation2] sm:$0xf]
    %v137 = vld [vmem:[#allocation2 + $0x4] sm:$0xf]
    %v138 = vld [vmem:[#allocation2 + $0x8] sm:$0xf]
    %v139 = vld [vmem:[#allocation2 + $0xc] sm:$0xf]
    %v140 = vld [vmem:[#allocation2 + $0x10] sm:$0xf]
    %v141 = vld [vmem:[#allocation2 + $0x14] sm:$0xf]
    %v142 = vld [vmem:[#allocation2 + $0x18] sm:$0xf]
    %v143 = vld [vmem:[#allocation2 + $0x1c] sm:$0xf]
    %v144 = vld [vmem:[#allocation2 + $0x20] sm:$0xf]
    %v154 = vunpack.c.l.b16 %v136
    %v155 = vunpack.c.l.b16 %v137
    %v156 = vunpack.c.l.b16 %v138
    %v157 = vunpack.c.l.b16 %v139
    %v158 = vunpack.c.l.b16 %v140
    %v159 = vunpack.c.l.b16 %v141
    %v160 = vunpack.c.l.b16 %v142
    %v161 = vunpack.c.l.b16 %v143
    %v162 = vunpack.c.l.b16 %v144
    %v163 = vpack.c.b16 %v155, %v154
    %v164 = vpack.c.b16 %v157, %v156
    %v165 = vpack.c.b16 %v159, %v158
    %v166 = vpack.c.b16 %v161, %v160
    %v167 = vpack.c.b16 %v162, %v162
    %vm172 = vcmask 588800
    %v174 = vsel %vm172, %v134, 0
    %v177 = vsel %vm172, %v135, 0
    %vm179 = vcmask 1043456
    %v181 = vsel %vm179, %v167, 0
    %183 = vmatprep.subr.bf16.mxu0 0
    %184 = vmatpush1.bf16.msra.mxu0 0
    %185 = vmatprep.subr.bf16.mxu0 0
    %186 = vmatpush1.bf16.msra.mxu0 0
    %187 = vmatprep.subr.bf16.mxu0 0
    %188 = vmatpush1.bf16.msra.mxu0 0
    %189 = vmatprep.subr.bf16.mxu0 0
    %190 = vmatpush1.bf16.msra.mxu0 %v181
    %191 = vmatprep.subr.bf16.mxu0 0
    %192 = vmatpush1.bf16.msra.mxu0 %v166
    %193 = vmatprep.subr.bf16.mxu0 0
    %194 = vmatpush1.bf16.msra.mxu0 %v165
    %195 = vmatprep.subr.bf16.mxu0 0
    %196 = vmatpush1.bf16.msra.mxu0 %v164
    %197 = vmatprep.subr.bf16.mxu0 0
    %198 = vmatpush1.bf16.msra.mxu0 %v163
    %199 = vmatprep.subr.bf16.mxu0 0
    %200 = vmatpush2.bf16.msra.mxu0 0
    %201 = vmatprep.subr.bf16.mxu0 0
    %202 = vmatpush2.bf16.msra.mxu0 0
    %203 = vmatprep.subr.bf16.mxu0 0
    %204 = vmatpush2.bf16.msra.mxu0 0
    %205 = vmatprep.subr.bf16.mxu0 0
    %206 = vmatpush2.bf16.msra.mxu0 0
    %207 = vmatprep.subr.bf16.mxu0 0
    %208 = vmatpush2.bf16.msra.mxu0 0
    %209 = vmatprep.subr.bf16.mxu0 0
    %210 = vmatpush2.bf16.msra.mxu0 0
    %211 = vmatprep.subr.bf16.mxu0 0
    %212 = vmatpush2.bf16.msra.mxu0 0
    %213 = vmatprep.subr.bf16.mxu0 0
    %214 = vmatpush2.bf16.msra.mxu0 0
    %215 = vmatprep.mubr.bf16.mxu0 0
    %216 = vmatmul.mubr.bf16.gmra.mxu0 %v174
    %v217 = vpop.f32.mrf.mxu0
    %v218 = vadd.f32 0.0, %v217
    %v219 = vpop.f32.mrf.mxu0
    %v220 = vpop.f32.mrf.mxu0
    %v221 = vadd.f32 0.0, %v220
    %v222 = vpop.f32.mrf.mxu0
    %223 = vmatprep.mubr.bf16.mxu0 0
    %224 = vmatmul.mubr.bf16.gmra.mxu0 %v177
    %v225 = vpop.f32.mrf.mxu0
    %v226 = vadd.f32 0.0, %v225
    %v227 = vpop.f32.mrf.mxu0
    %v228 = vpop.f32.mrf.mxu0
    %v229 = vpop.f32.mrf.mxu0
    %230 = vdwg.mxu0
    %231 = vst [vmem:[#allocation5] sm:$0xff] %v218
    %232 = vst [vmem:[#allocation5 + $0x8] sm:$0xff] %v221
    %233 = vst [vmem:[#allocation5 + $0x10] sm:$0xff] %v226
    // Predicated region
    $region14: #{tpu_custom_call.1} parent=1 // pred_check
      _
    $region15: #{tpu_custom_call.1} parent=1 // pred_check_branch
      %235 = sbr.rel (0) target = $region17
    $region16: #{tpu_custom_call.1} parent=1 // pred_region
      %s237 = ssub.s32 384, 384
      %238 = vsyncadd [#allocation4], %s237
      %s239 = sshll.u32 [#allocation5], 4
      %s240 = int_to_ptr.vmem [resolvable:$true] %s239
      %245 = dma.vmem_to_hbm [thread:$0]  %s240, 384, %s2, [#allocation4], 128, 128, 8
    $region17: #{tpu_custom_call.1} parent=1 // pred_fallthru
      _
    // Predicated region
    $region18: #{tpu_custom_call.1} parent=1 // pred_check
      _
    $region19: #{tpu_custom_call.1} parent=1 // pred_check_branch
      %247 = sbr.rel (0) target = $region21
    $region20: #{tpu_custom_call.1} parent=1 // pred_region
      %248 = dma.done [#allocation4], 384
    $region21: #{tpu_custom_call.1} parent=1 // pred_fallthru
      _
    %249 = vsyncpa [#allocation3], 1
    %250 = vsyncpa [#allocation4], 1

</llo_original>
